<compile_context>
chip_gen: v5e
topology: v5e:2x2
jax: 0.10.0
libtpu: 0.0.40
codegen_flags: <defaults>
</compile_context>

<pallas_src>
import functools

import jax
import jax.numpy as jnp
from jax.experimental import pallas as pl
from jax.experimental.pallas import tpu as pltpu


def _fused_ridge_kernel(bid_ref, x_ref, w_ref, o_ref, *, inner, subtiles):
    # bid_ref: (R_total/inner,) int32 in SMEM -- block id owning each inner sub-tile.
    # x_ref:   (Pmax, tile_rows) lane-dense feature tile (f32).
    # w_ref:   (B, Pmax, 1) full per-block weight stack, resident in VMEM.
    # o_ref:   (1, tile_rows) lane-dense prediction tile.
    t = pl.program_id(0)

    # Static Python unroll (subtiles is small, <= 64): every load/store gets a
    # fully static, 128-aligned lane offset; only the SMEM bid read and the
    # leading-axis weight lookup are dynamic.
    for k in range(subtiles):
        bid = bid_ref[t * subtiles + k]          # SMEM scalar read
        w = w_ref[bid]                           # (Pmax, 1) resident-VMEM lookup
        start = k * inner                        # static, multiple of 128
        x_sub = x_ref[:, pl.ds(start, inner)]    # (Pmax, inner)
        # VPU multiply + sublane (XLU) reduction; MXU stays idle on purpose.
        o_ref[:, pl.ds(start, inner)] = jnp.sum(x_sub * w, axis=0, keepdims=True)


def fused_ridge_predict(tile_bid, x_t, w_stack, *, inner, tile_rows):
    """One pallas_call predicting every block's rows.

    tile_bid: (R_total/inner,) int32 -- block id per inner sub-tile (SMEM prefetch)
    x_t:      (Pmax, R_total) f32    -- all blocks' rows, transposed, zero padded
    w_stack:  (B, Pmax, 1) f32       -- per-block ridge weights, zero padded
    returns:  (1, R_total) f32 predictions
    """
    pmax, r_total = x_t.shape
    nblocks = w_stack.shape[0]
    assert inner % 128 == 0, "inner sub-tile must be a lane multiple (128)"
    assert tile_rows % inner == 0
    assert pmax % 8 == 0, "feature dim must be padded to a sublane multiple (8)"
    assert r_total % tile_rows == 0
    num_tiles = r_total // tile_rows
    subtiles = tile_rows // inner

    grid_spec = pltpu.PrefetchScalarGridSpec(
        num_scalar_prefetch=1,
        grid=(num_tiles,),
        in_specs=[
            # Feature slab: walk lane-dense row tiles (double-buffered DMA).
            pl.BlockSpec((pmax, tile_rows), lambda t, bid: (0, t)),
            # Full weight stack; constant block index -> DMA'd to VMEM once and
            # kept resident (no per-step weight stream).
            pl.BlockSpec((nblocks, pmax, 1), lambda t, bid: (0, 0, 0)),
        ],
        out_specs=pl.BlockSpec((1, tile_rows), lambda t, bid: (0, t)),
    )
    cost = pl.CostEstimate(
        flops=2 * pmax * r_total,
        transcendentals=0,
        bytes_accessed=4 * (pmax * r_total + r_total + nblocks * pmax),
    )
    return pl.pallas_call(
        functools.partial(_fused_ridge_kernel, inner=inner, subtiles=subtiles),
        out_shape=jax.ShapeDtypeStruct((1, r_total), jnp.float32),
        grid_spec=grid_spec,
        compiler_params=pltpu.CompilerParams(
            # Megacore sharding on v7x; grid is a serial loop on v5e/v6e.
            dimension_semantics=("parallel",),
        ),
        cost_estimate=cost,
    )(tile_bid, x_t, w_stack)


@functools.partial(
    jax.jit,
    static_argnames=("Ls", "inner", "target_tile_rows", "vmem_budget_bytes"),
)
def _ridge_forward_impl(feature_blocks, weights, alpha, *, Ls, inner,
                        target_tile_rows, vmem_budget_bytes):
    # Common padded property dim (sublane axis of the transposed slab).
    # TODO(synk): if nprops varies widely across blocks, bucket blocks by
    # padded nprops into a few slabs instead of padding everything to Pmax.
    pmax = max(int(w.shape[0]) for w in weights)
    pmax = ((pmax + 7) // 8) * 8

    chunks = []
    bids = []
    row_info = []  # (rows, rows_pad) per block
    for i, x in enumerate(feature_blocks):
        nsamples, ncomps, nprops = x.shape
        rows = nsamples * ncomps
        rows_pad = max(inner, pl.cdiv(rows, inner) * inner)
        # Lane-dense per-block chunk (Pmax, rows_pad); padded rows / padded
        # property columns are zero, so they contribute nothing.
        xt = x.reshape(rows, nprops).astype(jnp.float32).T
        xt = jnp.pad(xt, ((0, pmax - nprops), (0, rows_pad - rows)))
        chunks.append(xt)
        bids.extend([i] * (rows_pad // inner))
        row_info.append((rows, rows_pad))

    r_blocks = sum(rp for _, rp in row_info)

    # Auto-size the DMA tile (lane width of one grid step):
    #  (a) large -> amortizes the ~0.35 us per-grid-step pipeline overhead,
    #  (b) double-buffered x tile stays within the VMEM budget,
    #  (c) keep >= ~8 grid steps when the data is big (v7x megacore + overlap),
    #  (d) never bigger than the data (no pointless zero padding on tiny inputs).
    max_rows_vmem = (vmem_budget_bytes // (2 * pmax * 4)) // inner * inner
    tile_rows = min(target_tile_rows, max(inner, max_rows_vmem))
    if r_blocks >= 8 * inner:
        tile_rows = min(tile_rows, max(inner, (r_blocks // 8) // inner * inner))
    tile_rows = max(inner, min(tile_rows, r_blocks))

    r_total = pl.cdiv(r_blocks, tile_rows) * tile_rows
    if r_total > r_blocks:
        chunks.append(jnp.zeros((pmax, r_total - r_blocks), jnp.float32))
        # Padding sub-tiles point at block 0; their features are zero so their
        # predictions are zero and they are never sliced back out.
        bids.extend([0] * ((r_total - r_blocks) // inner))

    x_t = jnp.concatenate(chunks, axis=1)                       # (Pmax, R_total)
    w_stack = jnp.stack(
        [jnp.pad(w, ((0, pmax - w.shape[0]), (0, 0))) for w in weights]
    )                                                           # (B, Pmax, 1)
    tile_bid = jnp.asarray(bids, dtype=jnp.int32)

    preds_flat = fused_ridge_predict(
        tile_bid, x_t, w_stack, inner=inner, tile_rows=tile_rows
    )

    preds = []
    regloss = jnp.float32(0.0)
    off = 0
    for L, x, w, (rows, rows_pad) in zip(Ls, feature_blocks, weights, row_info):
        nsamples = x.shape[0]
        preds.append(preds_flat[0, off:off + rows].reshape(nsamples, 2 * L + 1, 1))
        off += rows_pad
        # TODO(synk): exact RidgeBlockModel.regularization_loss semantics are
        # unavailable; use the standard ridge penalty alpha * ||w||^2.
        regloss = regloss + alpha * jnp.sum(w * w)
    return tuple(preds), regloss


class RidgeModelPallas:
    """JAX/Pallas re-implementation of RidgeModel.forward.

    Each "key" corresponds to one coupled-fock block with angular momentum L.
    The per-block model is a bias-free linear map from nprops features to one
    output (ridge regression weights).  All blocks are evaluated by a single
    fused Pallas kernel; marshaling + kernel + un-slicing run under one jax.jit.
    """

    def __init__(self, keys, nprops_per_block, alpha=1.0, bias=False, seed=0,
                 inner_rows=128, target_tile_rows=8192,
                 vmem_budget_bytes=10 * 1024 * 1024):
        assert not bias, "bias=False is the RidgeModel default; not exercised here"
        assert inner_rows % 128 == 0, "inner_rows must be a multiple of 128 (lane dim)"
        assert target_tile_rows % inner_rows == 0
        self.alpha = float(alpha)
        self.keys = keys  # list of dicts, each containing at least 'L'
        self.inner_rows = inner_rows
        self.target_tile_rows = target_tile_rows
        self.vmem_budget_bytes = vmem_budget_bytes
        self.weights = []
        key = jax.random.PRNGKey(seed)
        for nprops in nprops_per_block:
            key, sub = jax.random.split(key)
            # Deterministic init, analogous to nn.Linear(nprops, 1, bias=False).
            w = jax.random.normal(sub, (nprops, 1), dtype=jnp.float32) * (
                1.0 / jnp.sqrt(nprops)
            )
            self.weights.append(w)

    def forward(self, feature_blocks):
        """feature_blocks: list of arrays, block i shaped (nsamples, 2L_i+1, nprops_i).
        Returns (list of predictions shaped (nsamples, 2L_i+1, 1), reg loss)."""
        Ls = tuple(int(k["L"]) for k in self.keys)
        preds, regloss = _ridge_forward_impl(
            tuple(feature_blocks),
            tuple(self.weights),
            jnp.float32(self.alpha),
            Ls=Ls,
            inner=self.inner_rows,
            target_tile_rows=self.target_tile_rows,
            vmem_budget_bytes=self.vmem_budget_bytes,
        )
        return list(preds), regloss


if __name__ == "__main__":
    # Small synthetic TensorMap-like setup: three blocks with L = 0, 1, 2.
    nsamples = 8
    nprops = 32
    keys = [{"L": 0}, {"L": 1}, {"L": 2}]
    nprops_per_block = [nprops] * len(keys)

    model = RidgeModelPallas(keys, nprops_per_block, alpha=1.0, bias=False, seed=0)

    rng = jax.random.PRNGKey(0)
    feature_blocks = []
    for k in keys:
        rng, sub = jax.random.split(rng)
        feature_blocks.append(
            jax.random.normal(
                sub, (nsamples, 2 * k["L"] + 1, nprops), dtype=jnp.float32
            )
        )

    preds, regloss = model.forward(feature_blocks)
    preds = [jax.block_until_ready(p) for p in preds]
    jax.block_until_ready(regloss)

    # Correctness check against a plain-JAX reference of the same math.
    for x, w, p, k in zip(feature_blocks, model.weights, preds, keys):
        ref = jnp.einsum(
            "rp,po->ro",
            x.reshape(-1, x.shape[-1]),
            w,
            precision=jax.lax.Precision.HIGHEST,
        ).reshape(x.shape[0], 2 * k["L"] + 1, 1)
        assert p.shape == ref.shape, "shape mismatch vs reference"
        assert jnp.allclose(p, ref, atol=1e-4, rtol=1e-4), "mismatch vs reference"

    print("KERNEL_OK")
</pallas_src>

<mosaic_0001>
module attributes {stable_mosaic.version = 11 : i64} {
  func.func @_fused_ridge_kernel(%arg0: i32, %arg1: memref<3xi32, #tpu.memory_space<smem>>, %arg2: memref<32x384xf32, #tpu.memory_space<vmem>>, %arg3: memref<3x32x1xf32, #tpu.memory_space<vmem>>, %arg4: memref<1x384xf32, #tpu.memory_space<vmem>>) attributes {dimension_semantics = [#tpu.dimension_semantics<parallel>], iteration_bounds = array<i64: 1>, scalar_prefetch = 1 : i64, scratch_operands = 0 : i64, tpu.core_type = #tpu.core_type<tc>, window_params = [{transform_indices = @transform_0, window_bounds = array<i64: 32, 384>}, {pipeline_mode = #tpu.pipeline_mode<synchronous>, transform_indices = @transform_1, window_bounds = array<i64: 3, 32, 1>}, {transform_indices = @transform_2, window_bounds = array<i64: 1, 384>}]} {
    %c3_i32 = arith.constant 3 : i32
    %0 = arith.muli %arg0, %c3_i32 : i32
    %c0_i32 = arith.constant 0 : i32
    %1 = arith.addi %0, %c0_i32 : i32
    %2 = arith.index_cast %1 : i32 to index
    %3 = memref.load %arg1[%2] : memref<3xi32, #tpu.memory_space<smem>>
    %4 = arith.index_cast %3 : i32 to index
    %c0 = arith.constant 0 : index
    %c0_0 = arith.constant 0 : index
    %5 = vector.load %arg3[%4, %c0, %c0_0] : memref<3x32x1xf32, #tpu.memory_space<vmem>>, vector<1x32x1xf32>
    %6 = vector.shape_cast %5 : vector<1x32x1xf32> to vector<32x1xf32>
    %c0_1 = arith.constant 0 : index
    %c0_2 = arith.constant 0 : index
    %7 = vector.load %arg2[%c0_1, %c0_2] : memref<32x384xf32, #tpu.memory_space<vmem>>, vector<32x128xf32>
    %8 = vector.broadcast %6 : vector<32x1xf32> to vector<32x128xf32>
    %9 = arith.mulf %7, %8 : vector<32x128xf32>
    %cst = arith.constant dense<0.000000e+00> : vector<128xf32>
    %10 = vector.multi_reduction <add>, %9, %cst [0] : vector<32x128xf32> to vector<128xf32>
    %11 = vector.shape_cast %10 : vector<128xf32> to vector<1x128xf32>
    %c0_3 = arith.constant 0 : index
    %c0_4 = arith.constant 0 : index
    %12 = vector.load %arg4[%c0_3, %c0_4] : memref<1x384xf32, #tpu.memory_space<vmem>>, vector<1x128xf32>
    tpu.vector_store %arg4[%c0_3, %c0_4], %11 {strides = array<i32>} : memref<1x384xf32, #tpu.memory_space<vmem>>, vector<1x128xf32>,
    %c3_i32_5 = arith.constant 3 : i32
    %13 = arith.muli %arg0, %c3_i32_5 : i32
    %c1_i32 = arith.constant 1 : i32
    %14 = arith.addi %13, %c1_i32 : i32
    %15 = arith.index_cast %14 : i32 to index
    %16 = memref.load %arg1[%15] : memref<3xi32, #tpu.memory_space<smem>>
    %17 = arith.index_cast %16 : i32 to index
    %c0_6 = arith.constant 0 : index
    %c0_7 = arith.constant 0 : index
    %18 = vector.load %arg3[%17, %c0_6, %c0_7] : memref<3x32x1xf32, #tpu.memory_space<vmem>>, vector<1x32x1xf32>
    %19 = vector.shape_cast %18 : vector<1x32x1xf32> to vector<32x1xf32>
    %c0_8 = arith.constant 0 : index
    %c128 = arith.constant 128 : index
    %20 = vector.load %arg2[%c0_8, %c128] : memref<32x384xf32, #tpu.memory_space<vmem>>, vector<32x128xf32>
    %21 = vector.broadcast %19 : vector<32x1xf32> to vector<32x128xf32>
    %22 = arith.mulf %20, %21 : vector<32x128xf32>
    %cst_9 = arith.constant dense<0.000000e+00> : vector<128xf32>
    %23 = vector.multi_reduction <add>, %22, %cst_9 [0] : vector<32x128xf32> to vector<128xf32>
    %24 = vector.shape_cast %23 : vector<128xf32> to vector<1x128xf32>
    %c0_10 = arith.constant 0 : index
    %c128_11 = arith.constant 128 : index
    %25 = vector.load %arg4[%c0_10, %c128_11] : memref<1x384xf32, #tpu.memory_space<vmem>>, vector<1x128xf32>
    tpu.vector_store %arg4[%c0_10, %c128_11], %24 {strides = array<i32>} : memref<1x384xf32, #tpu.memory_space<vmem>>, vector<1x128xf32>,
    %c3_i32_12 = arith.constant 3 : i32
    %26 = arith.muli %arg0, %c3_i32_12 : i32
    %c2_i32 = arith.constant 2 : i32
    %27 = arith.addi %26, %c2_i32 : i32
    %28 = arith.index_cast %27 : i32 to index
    %29 = memref.load %arg1[%28] : memref<3xi32, #tpu.memory_space<smem>>
    %30 = arith.index_cast %29 : i32 to index
    %c0_13 = arith.constant 0 : index
    %c0_14 = arith.constant 0 : index
    %31 = vector.load %arg3[%30, %c0_13, %c0_14] : memref<3x32x1xf32, #tpu.memory_space<vmem>>, vector<1x32x1xf32>
    %32 = vector.shape_cast %31 : vector<1x32x1xf32> to vector<32x1xf32>
    %c0_15 = arith.constant 0 : index
    %c256 = arith.constant 256 : index
    %33 = vector.load %arg2[%c0_15, %c256] : memref<32x384xf32, #tpu.memory_space<vmem>>, vector<32x128xf32>
    %34 = vector.broadcast %32 : vector<32x1xf32> to vector<32x128xf32>
    %35 = arith.mulf %33, %34 : vector<32x128xf32>
    %cst_16 = arith.constant dense<0.000000e+00> : vector<128xf32>
    %36 = vector.multi_reduction <add>, %35, %cst_16 [0] : vector<32x128xf32> to vector<128xf32>
    %37 = vector.shape_cast %36 : vector<128xf32> to vector<1x128xf32>
    %c0_17 = arith.constant 0 : index
    %c256_18 = arith.constant 256 : index
    %38 = vector.load %arg4[%c0_17, %c256_18] : memref<1x384xf32, #tpu.memory_space<vmem>>, vector<1x128xf32>
    tpu.vector_store %arg4[%c0_17, %c256_18], %37 {strides = array<i32>} : memref<1x384xf32, #tpu.memory_space<vmem>>, vector<1x128xf32>,
    return
  }
  func.func @transform_0(%arg0: i32, %arg1: memref<3xi32, #tpu.memory_space<smem>>) -> (i32, i32) {
    %c0_i32 = arith.constant 0 : i32
    %c0_i32_0 = arith.constant 0 : i32
    return %c0_i32, %arg0 : i32, i32
  }
  func.func @transform_1(%arg0: i32, %arg1: memref<3xi32, #tpu.memory_space<smem>>) -> (i32, i32, i32) {
    %c0_i32 = arith.constant 0 : i32
    %c0_i32_0 = arith.constant 0 : i32
    %c0_i32_1 = arith.constant 0 : i32
    %c0_i32_2 = arith.constant 0 : i32
    return %c0_i32, %c0_i32_0, %c0_i32_1 : i32, i32, i32
  }
  func.func @transform_2(%arg0: i32, %arg1: memref<3xi32, #tpu.memory_space<smem>>) -> (i32, i32) {
    %c0_i32 = arith.constant 0 : i32
    %c0_i32_0 = arith.constant 0 : i32
    return %c0_i32, %arg0 : i32, i32
  }
}

</mosaic_0001>

<llo_original>
// kernel: squeeze.5
$region0: #{squeeze.5}
  %s0 = inlined_call_operand.vmem [shape: f32[40], index: 0, kind: input, shape index: {}]
  %s1 = inlined_call_operand.vmem [shape: f32[8,5,1], index: 1, kind: output, shape index: {}]
  $region1: #{squeeze.5} parent=0
    #allocation0 [shape = 'u8[4096]{0}', space=vmem, size = 0x1000, scoped, tag = 'scoped mem for input reshape']
    %s3 = ssub.s32 2, 1
    %v4 = vld [vmem:[%s0] sm:%s3]
    %5 = vst [vmem:[#allocation0] sm:%s3] %v4
    %v6 = vld [vmem:[#allocation0] sm:$0x1]
    %vm7 = vcmask 39936
    %8 = vst.msk [vmem:[%s1] sm:$0x1] %vm7, %v6
    %v9 = vld [vmem:[#allocation0] sm:$0x1]
    %10 = vrot.lane.b32.xlu0 %v9, 123
    %v11 = vpop.permute.xlu0 %10
    %vm12 = vcmask 39936
    %s13 = scalar_lea.vmem %s1, 1
    %14 = vst.msk [vmem:[%s13] sm:$0x1] %vm12, %v11
    %v15 = vld [vmem:[#allocation0] sm:$0x1]
    %16 = vrot.lane.b32.xlu0 %v15, 118
    %v17 = vpop.permute.xlu0 %16
    %vm18 = vcmask 39936
    %s19 = scalar_lea.vmem %s1, 2
    %20 = vst.msk [vmem:[%s19] sm:$0x1] %vm18, %v17
    %v21 = vld [vmem:[#allocation0] sm:$0x1]
    %22 = vrot.lane.b32.xlu0 %v21, 113
    %v23 = vpop.permute.xlu0 %22
    %vm24 = vcmask 39936
    %s25 = scalar_lea.vmem %s1, 3
    %26 = vst.msk [vmem:[%s25] sm:$0x1] %vm24, %v23
    %v27 = vld [vmem:[#allocation0] sm:$0x1]
    %28 = vrot.lane.b32.xlu0 %v27, 108
    %v29 = vpop.permute.xlu0 %28
    %vm30 = vcmask 39936
    %s31 = scalar_lea.vmem %s1, 4
    %32 = vst.msk [vmem:[%s31] sm:$0x1] %vm30, %v29
    %v33 = vld [vmem:[#allocation0] sm:$0x1]
    %34 = vrot.lane.b32.xlu0 %v33, 103
    %v35 = vpop.permute.xlu0 %34
    %vm36 = vcmask 39936
    %s37 = scalar_lea.vmem %s1, 5
    %38 = vst.msk [vmem:[%s37] sm:$0x1] %vm36, %v35
    %v39 = vld [vmem:[#allocation0] sm:$0x1]
    %40 = vrot.lane.b32.xlu0 %v39, 98
    %v41 = vpop.permute.xlu0 %40
    %vm42 = vcmask 39936
    %s43 = scalar_lea.vmem %s1, 6
    %44 = vst.msk [vmem:[%s43] sm:$0x1] %vm42, %v41
    %v45 = vld [vmem:[#allocation0] sm:$0x1]
    %46 = vrot.lane.b32.xlu0 %v45, 93
    %v47 = vpop.permute.xlu0 %46
    %vm48 = vcmask 39936
    %s49 = scalar_lea.vmem %s1, 7
    %50 = vst.msk [vmem:[%s49] sm:$0x1] %vm48, %v47

// kernel: squeeze.4
$region0: #{squeeze.4}
  %s0 = inlined_call_operand.vmem [shape: f32[24], index: 0, kind: input, shape index: {}]
  %s1 = inlined_call_operand.vmem [shape: f32[8,3,1], index: 1, kind: output, shape index: {}]
  $region1: #{squeeze.4} parent=0
    #allocation0 [shape = 'u8[4096]{0}', space=vmem, size = 0x1000, scoped, tag = 'scoped mem for input reshape']
    %s3 = ssub.s32 2, 1
    %v4 = vld [vmem:[%s0] sm:%s3]
    %5 = vst [vmem:[#allocation0] sm:%s3] %v4
    %v6 = vld [vmem:[#allocation0] sm:$0x1]
    %vm7 = vcmask 23552
    %8 = vst.msk [vmem:[%s1] sm:$0x1] %vm7, %v6
    %v9 = vld [vmem:[#allocation0] sm:$0x1]
    %10 = vrot.lane.b32.xlu0 %v9, 125
    %v11 = vpop.permute.xlu0 %10
    %vm12 = vcmask 23552
    %s13 = scalar_lea.vmem %s1, 1
    %14 = vst.msk [vmem:[%s13] sm:$0x1] %vm12, %v11
    %v15 = vld [vmem:[#allocation0] sm:$0x1]
    %16 = vrot.lane.b32.xlu0 %v15, 122
    %v17 = vpop.permute.xlu0 %16
    %vm18 = vcmask 23552
    %s19 = scalar_lea.vmem %s1, 2
    %20 = vst.msk [vmem:[%s19] sm:$0x1] %vm18, %v17
    %v21 = vld [vmem:[#allocation0] sm:$0x1]
    %22 = vrot.lane.b32.xlu0 %v21, 119
    %v23 = vpop.permute.xlu0 %22
    %vm24 = vcmask 23552
    %s25 = scalar_lea.vmem %s1, 3
    %26 = vst.msk [vmem:[%s25] sm:$0x1] %vm24, %v23
    %v27 = vld [vmem:[#allocation0] sm:$0x1]
    %28 = vrot.lane.b32.xlu0 %v27, 116
    %v29 = vpop.permute.xlu0 %28
    %vm30 = vcmask 23552
    %s31 = scalar_lea.vmem %s1, 4
    %32 = vst.msk [vmem:[%s31] sm:$0x1] %vm30, %v29
    %v33 = vld [vmem:[#allocation0] sm:$0x1]
    %34 = vrot.lane.b32.xlu0 %v33, 113
    %v35 = vpop.permute.xlu0 %34
    %vm36 = vcmask 23552
    %s37 = scalar_lea.vmem %s1, 5
    %38 = vst.msk [vmem:[%s37] sm:$0x1] %vm36, %v35
    %v39 = vld [vmem:[#allocation0] sm:$0x1]
    %40 = vrot.lane.b32.xlu0 %v39, 110
    %v41 = vpop.permute.xlu0 %40
    %vm42 = vcmask 23552
    %s43 = scalar_lea.vmem %s1, 6
    %44 = vst.msk [vmem:[%s43] sm:$0x1] %vm42, %v41
    %v45 = vld [vmem:[#allocation0] sm:$0x1]
    %46 = vrot.lane.b32.xlu0 %v45, 107
    %v47 = vpop.permute.xlu0 %46
    %vm48 = vcmask 23552
    %s49 = scalar_lea.vmem %s1, 7
    %50 = vst.msk [vmem:[%s49] sm:$0x1] %vm48, %v47

// kernel: _ridge_forward_impl.1
$region0: #{_ridge_forward_impl.1}
  #allocation0 [shape = 'u32[]', space=smem, size = 0x4, offset = 0x4, fixed_abs, tag = 'smem constant byte address 0x4 - core index']
  #allocation1 [shape = 'u32[72,128]{1,0:T(1,128)}', space=vmem, size = 0x9000, scoped, tag = 'internal scratch']
  #allocation2 [shape = 's32[1]{0}', space=sflag, size = 0x4, scoped, tag = 'scoped memory for _ridge_forward_impl.1']
  #allocation3 [shape = 'u8[512]{0}', space=smem, size = 0x200, scoped, tag = 'prefetched SMEM operand 0']
  %s0 = inlined_call_operand.vmem [shape: s32[3], index: 0, kind: input, shape index: {}]
  %s1 = inlined_call_operand.vmem [shape: f32[32,384], index: 1, kind: input, shape index: {}]
  %s2 = inlined_call_operand.vmem [shape: f32[3,32,1], index: 2, kind: input, shape index: {}]
  %s3 = inlined_call_operand.vmem [shape: f32[1,384], index: 3, kind: output, shape index: {}]
  %s4 = sld [smem:[#allocation0]]
  $region18: #{_ridge_forward_impl.1} parent=0
    _
  %s6 = ssub.s32 1, %s4
  %s7 = scalar_select 0, %s6, %s4
  %s9 = sshll.u32 %s0, 4
  %s10 = int_to_ptr.vmem [resolvable:$true] %s9
  %12 = dma.vmem_to_smem %s10, 16, [#allocation3], [#allocation2]
  %14 = dma.done [#allocation2], 16
  %15 = sfence
  // Predicated region
  $region2: #{_ridge_forward_impl.1} parent=0 // pred_check
    _
  $region3: #{_ridge_forward_impl.1} parent=0 // pred_check_branch
    %17 = sbr.rel (0) target = $region5
  $region4: #{_ridge_forward_impl.1} parent=0 // pred_region
    _
  $region5: #{_ridge_forward_impl.1} parent=0 // pred_fallthru
    _
  // Predicated region
  $region6: #{_ridge_forward_impl.1} parent=0 // pred_check
    _
  $region7: #{_ridge_forward_impl.1} parent=0 // pred_check_branch
    %19 = sbr.rel (0) target = $region9
  $region8: #{_ridge_forward_impl.1} parent=0 // pred_region
    _
  $region9: #{_ridge_forward_impl.1} parent=0 // pred_fallthru
    _
  %s20 = smul.u32 0, 3
  %s21 = sld [smem:[#allocation3 + %s20]]
  %s22 = smul.u32 %s21, 32
  %s23 = scalar_lea.vmem %s2, %s22
  %v24 = vld [vmem:[%s23] sm:$0xff]
  %v25 = vld [vmem:[%s23 + $0x8] sm:$0xff]
  %v26 = vld [vmem:[%s23 + $0x10] sm:$0xff]
  %v27 = vld [vmem:[%s23 + $0x18] sm:$0xff]
  %v28 = vld [vmem:[%s1] sm:$0xff]
  %v29 = vld [vmem:[%s1 + $0x18] sm:$0xff]
  %v30 = vld [vmem:[%s1 + $0x30] sm:$0xff]
  %v31 = vld [vmem:[%s1 + $0x48] sm:$0xff]
  %33 = vset.pattern.permute.xlu0 0
  %34 = vperm.xlu0 %33, %v24
  %v35 = vpop.permute.xlu0 %34
  %38 = vset.pattern.permute.xlu0 0
  %39 = vperm.xlu0 %38, %v25
  %v40 = vpop.permute.xlu0 %39
  %43 = vset.pattern.permute.xlu0 0
  %44 = vperm.xlu0 %43, %v26
  %v45 = vpop.permute.xlu0 %44
  %48 = vset.pattern.permute.xlu0 0
  %49 = vperm.xlu0 %48, %v27
  %v50 = vpop.permute.xlu0 %49
  %v52 = vmul.f32 %v28, %v35
  %v53 = vmul.f32 %v29, %v40
  %v54 = vmul.f32 %v30, %v45
  %v55 = vmul.f32 %v31, %v50
  %v56 = vadd.f32 %v52, %v53
  %v57 = vadd.f32 %v56, %v54
  %v58 = vadd.f32 %v57, %v55
  %v59 = vrot.slane %v58, 4
  %v60 = vadd.f32 %v58, %v59
  %v61 = vrot.slane %v60, 2
  %v62 = vadd.f32 %v60, %v61
  %v63 = vrot.slane %v62, 1
  %v64 = vadd.f32 %v62, %v63
  %v65 = vlaneseq
  %vm66 = vcmp.ge.s32.totalorder %v65, 0
  %vm67 = vcmp.lt.s32.totalorder %v65, 128
  %vm68 = vmand %vm66, %vm67
  %69 = vst.msk [vmem:[%s3] sm:$0x1] %vm68, %v64
  %s70 = sadd.s32 %s20, 1
  %s71 = sld [smem:[#allocation3 + %s70]]
  %s72 = smul.u32 %s71, 32
  %s73 = scalar_lea.vmem %s2, %s72
  %v74 = vld [vmem:[%s73] sm:$0xff]
  %v75 = vld [vmem:[%s73 + $0x8] sm:$0xff]
  %v76 = vld [vmem:[%s73 + $0x10] sm:$0xff]
  %v77 = vld [vmem:[%s73 + $0x18] sm:$0xff]
  %v78 = vld [vmem:[%s1 + $0x8] sm:$0xff]
  %v79 = vld [vmem:[%s1 + $0x20] sm:$0xff]
  %v80 = vld [vmem:[%s1 + $0x38] sm:$0xff]
  %v81 = vld [vmem:[%s1 + $0x50] sm:$0xff]
  %83 = vset.pattern.permute.xlu0 0
  %84 = vperm.xlu0 %83, %v74
  %v85 = vpop.permute.xlu0 %84
  %88 = vset.pattern.permute.xlu0 0
  %89 = vperm.xlu0 %88, %v75
  %v90 = vpop.permute.xlu0 %89
  %93 = vset.pattern.permute.xlu0 0
  %94 = vperm.xlu0 %93, %v76
  %v95 = vpop.permute.xlu0 %94
  %98 = vset.pattern.permute.xlu0 0
  %99 = vperm.xlu0 %98, %v77
  %v100 = vpop.permute.xlu0 %99
  %v102 = vmul.f32 %v78, %v85
  %v103 = vmul.f32 %v79, %v90
  %v104 = vmul.f32 %v80, %v95
  %v105 = vmul.f32 %v81, %v100
  %v106 = vadd.f32 %v102, %v103
  %v107 = vadd.f32 %v106, %v104
  %v108 = vadd.f32 %v107, %v105
  %v109 = vrot.slane %v108, 4
  %v110 = vadd.f32 %v108, %v109
  %v111 = vrot.slane %v110, 2
  %v112 = vadd.f32 %v110, %v111
  %v113 = vrot.slane %v112, 1
  %v114 = vadd.f32 %v112, %v113
  %115 = vst.msk [vmem:[%s3 + $0x1] sm:$0x1] %vm68, %v114
  %s116 = sadd.s32 %s20, 2
  %s117 = sld [smem:[#allocation3 + %s116]]
  %s118 = smul.u32 %s117, 32
  %s119 = scalar_lea.vmem %s2, %s118
  %v120 = vld [vmem:[%s119] sm:$0xff]
  %v121 = vld [vmem:[%s119 + $0x8] sm:$0xff]
  %v122 = vld [vmem:[%s119 + $0x10] sm:$0xff]
  %v123 = vld [vmem:[%s119 + $0x18] sm:$0xff]
  %v124 = vld [vmem:[%s1 + $0x10] sm:$0xff]
  %v125 = vld [vmem:[%s1 + $0x28] sm:$0xff]
  %v126 = vld [vmem:[%s1 + $0x40] sm:$0xff]
  %v127 = vld [vmem:[%s1 + $0x58] sm:$0xff]
  %129 = vset.pattern.permute.xlu0 0
  %130 = vperm.xlu0 %129, %v120
  %v131 = vpop.permute.xlu0 %130
  %134 = vset.pattern.permute.xlu0 0
  %135 = vperm.xlu0 %134, %v121
  %v136 = vpop.permute.xlu0 %135
  %139 = vset.pattern.permute.xlu0 0
  %140 = vperm.xlu0 %139, %v122
  %v141 = vpop.permute.xlu0 %140
  %144 = vset.pattern.permute.xlu0 0
  %145 = vperm.xlu0 %144, %v123
  %v146 = vpop.permute.xlu0 %145
  %v148 = vmul.f32 %v124, %v131
  %v149 = vmul.f32 %v125, %v136
  %v150 = vmul.f32 %v126, %v141
  %v151 = vmul.f32 %v127, %v146
  %v152 = vadd.f32 %v148, %v149
  %v153 = vadd.f32 %v152, %v150
  %v154 = vadd.f32 %v153, %v151
  %v155 = vrot.slane %v154, 4
  %v156 = vadd.f32 %v154, %v155
  %v157 = vrot.slane %v156, 2
  %v158 = vadd.f32 %v156, %v157
  %v159 = vrot.slane %v158, 1
  %v160 = vadd.f32 %v158, %v159
  %161 = vst.msk [vmem:[%s3 + $0x2] sm:$0x1] %vm68, %v160
  // Predicated region
  $region10: #{_ridge_forward_impl.1} parent=0 // pred_check
    _
  $region11: #{_ridge_forward_impl.1} parent=0 // pred_check_branch
    %163 = sbr.rel (0) target = $region13
  $region12: #{_ridge_forward_impl.1} parent=0 // pred_region
    _
  $region13: #{_ridge_forward_impl.1} parent=0 // pred_fallthru
    _
  // Predicated region
  $region14: #{_ridge_forward_impl.1} parent=0 // pred_check
    _
  $region15: #{_ridge_forward_impl.1} parent=0 // pred_check_branch
    %165 = sbr.rel (0) target = $region17
  $region16: #{_ridge_forward_impl.1} parent=0 // pred_region
    _
  $region17: #{_ridge_forward_impl.1} parent=0 // pred_fallthru
    _

</llo_original>
